<compile_context>
chip_gen: v7x
topology: tpu7x:2x2x1
jax: 0.10.0
libtpu: 0.0.40
codegen_flags: <defaults>
</compile_context>

<pallas_src>
import functools
import math

import jax
import jax.numpy as jnp
from jax.experimental import pallas as pl
from jax.experimental.pallas import tpu as pltpu


# ---------------------------------------------------------------------------
# VMEM budget helper (generation-aware)
# ---------------------------------------------------------------------------
def _vmem_limit(bytes_needed):
    cap = 128 * 1024 * 1024
    try:
        cap = int(getattr(pltpu.get_tpu_info(), "vmem_capacity_bytes", cap))
    except Exception:  # pragma: no cover - CPU interpret / old runtime
        pass
    hi = int(0.75 * cap)
    return int(min(hi, max(32 * 1024 * 1024, 4 * int(bytes_needed))))


# ---------------------------------------------------------------------------
# Fused Pallas kernel: pairwise squared dist -> k-NN density -> DPC score
# ---------------------------------------------------------------------------
def _fused_dpc_score_kernel(x_ref, noise_ref, score_ref, *, k, C):
    """score[0, 0, i] = (min dist to any higher-density token) * density[i]."""
    N = x_ref.shape[1]
    xb = x_ref[0]                                            # (N, C) native dtype
    xf = xb.astype(jnp.float32)
    sq = jnp.sum(xf * xf, axis=-1, keepdims=True)            # (N, 1) f32
    gram = jax.lax.dot_general(                              # MXU: x @ x^T, f32 acc
        xb, xb, (((1,), (1,)), ((), ())),
        preferred_element_type=jnp.float32)                  # (N, N)
    d2 = jnp.maximum(sq + sq.T - 2.0 * gram, 0.0)            # squared distances

    # k smallest squared distances per row (with multiplicity, includes the
    # near-zero self-distance), via k unrolled min + single-occurrence masking.
    iota = jax.lax.broadcasted_iota(jnp.int32, (N, N), 1)    # int32, hoisted
    n_i = jnp.int32(N)
    cur = d2
    acc = jnp.zeros((N, 1), jnp.float32)
    for _ in range(k):
        m = jnp.min(cur, axis=-1, keepdims=True)             # (N, 1)
        acc = acc + m
        first = jnp.min(jnp.where(cur == m, iota, n_i),
                        axis=-1, keepdims=True)              # first argmin (int32)
        cur = jnp.where(iota == first, jnp.inf, cur)

    # dist_nearest = sqrt(d2)/sqrt(C)  =>  mean(dist_nearest^2) = sum(d2)/(k*C)
    density = jnp.exp(-acc * (1.0 / (k * C))) + noise_ref[0].T   # (N, 1)
    density_row = density.T                                      # (1, N)
    d2max = jnp.max(d2)                                          # per-batch max
    val = jnp.where(density_row > density, d2, d2max)            # masked via where
    dist2 = jnp.min(val, axis=-1, keepdims=True)                 # (N, 1)
    dist = jnp.sqrt(dist2) * (1.0 / math.sqrt(C))                # sqrt only on (N,1)
    score_ref[0] = (dist * density).T                            # (1, N) lane-dense


def dpc_score_fused(x, noise_row, k):
    """x: (B, N, C) native dtype, noise_row: (B, 1, N) f32 -> score (B, N) f32."""
    B, N, C = x.shape
    itemsize = jnp.dtype(x.dtype).itemsize
    vmem_need = 6 * N * N * 4 + 2 * N * C * itemsize + 16 * N * 4
    cost = pl.CostEstimate(
        flops=B * (2 * N * N * C + (5 + 3 * k) * N * N),
        transcendentals=2 * B * N,
        bytes_accessed=B * (N * C * itemsize + 2 * N * 4),
    )
    score = pl.pallas_call(
        functools.partial(_fused_dpc_score_kernel, k=k, C=C),
        out_shape=jax.ShapeDtypeStruct((B, 1, N), jnp.float32),
        grid=(B,),
        in_specs=[
            pl.BlockSpec((1, N, C), lambda i: (i, 0, 0)),
            pl.BlockSpec((1, 1, N), lambda i: (i, 0, 0)),
        ],
        out_specs=pl.BlockSpec((1, 1, N), lambda i: (i, 0, 0)),
        compiler_params=pltpu.CompilerParams(
            dimension_semantics=("parallel",),
            vmem_limit_bytes=_vmem_limit(vmem_need)),
        cost_estimate=cost,
    )(x, noise_row)
    return score[:, 0, :]


# ---------------------------------------------------------------------------
# Pallas kernel: assign every token to its nearest cluster center (argmin)
# ---------------------------------------------------------------------------
def _assign_cluster_kernel(x_ref, c_ref, idx_ref):
    N = x_ref.shape[1]
    S = c_ref.shape[1]
    xb = x_ref[0]                                            # (N, C) native dtype
    cb = c_ref[0]                                            # (S, C) native dtype
    xf = xb.astype(jnp.float32)
    cf = cb.astype(jnp.float32)
    sq_x = jnp.sum(xf * xf, axis=-1, keepdims=True)          # (N, 1)
    sq_c = jnp.sum(cf * cf, axis=-1, keepdims=True)          # (S, 1)
    gram = jax.lax.dot_general(                              # MXU: centers @ x^T
        cb, xb, (((1,), (1,)), ((), ())),
        preferred_element_type=jnp.float32)                  # (S, N)
    d2 = jnp.maximum(sq_c + sq_x.T - 2.0 * gram, 0.0)        # (S, N) squared
    m = jnp.min(d2, axis=0, keepdims=True)                   # (1, N)
    iota_s = jax.lax.broadcasted_iota(jnp.int32, (S, N), 0)  # int32, no cast
    idx = jnp.min(jnp.where(d2 == m, iota_s, jnp.int32(S)),
                  axis=0, keepdims=True)                     # first argmin
    idx_ref[0] = idx                                         # (1, N) lane-dense


def assign_clusters(x, centers):
    """x: (B, N, C), centers: (B, S, C) -> (B, N) int32 nearest-center index."""
    B, N, C = x.shape
    S = centers.shape[1]
    itemsize = jnp.dtype(x.dtype).itemsize
    vmem_need = 4 * S * N * 4 + 2 * (N * C + S * C) * itemsize + 16 * N * 4
    cost = pl.CostEstimate(
        flops=B * (2 * S * N * C + 5 * S * N),
        transcendentals=0,
        bytes_accessed=B * ((N * C + S * C) * itemsize + N * 4),
    )
    idx = pl.pallas_call(
        _assign_cluster_kernel,
        out_shape=jax.ShapeDtypeStruct((B, 1, N), jnp.int32),
        grid=(B,),
        in_specs=[
            pl.BlockSpec((1, N, C), lambda i: (i, 0, 0)),
            pl.BlockSpec((1, S, C), lambda i: (i, 0, 0)),
        ],
        out_specs=pl.BlockSpec((1, 1, N), lambda i: (i, 0, 0)),
        compiler_params=pltpu.CompilerParams(
            dimension_semantics=("parallel",),
            vmem_limit_bytes=_vmem_limit(vmem_need)),
        cost_estimate=cost,
    )(x, centers)
    return idx[:, 0, :]


# ---------------------------------------------------------------------------
# JAX glue reproducing the PyTorch reference semantics
# ---------------------------------------------------------------------------
def index_points(points, idx):
    """points: (B, N, C), idx: (B, S) -> (B, S, C)."""
    B, S = idx.shape
    C = points.shape[-1]
    idx_b = jnp.broadcast_to(idx[..., None].astype(jnp.int32), (B, S, C))
    return jnp.take_along_axis(points, idx_b, axis=1)


def _cluster_dpc_knn_masked_jax(x, noise, k, cluster_num, token_mask):
    """Reference-faithful masked path (needs the global all-batch dist max)."""
    B, N, C = x.shape
    xf = x.astype(jnp.float32)
    sq = jnp.sum(xf * xf, axis=-1)
    d2 = sq[:, :, None] + sq[:, None, :] - 2.0 * jnp.einsum('bic,bjc->bij', xf, xf)
    dist_matrix = jnp.sqrt(jnp.maximum(d2, 0.0)) / math.sqrt(C)
    tm = token_mask > 0
    dist_matrix = (dist_matrix * tm[:, None, :]
                   + (jnp.max(dist_matrix) + 1.0) * (~tm[:, None, :]))
    neg, _ = jax.lax.top_k(-dist_matrix, k)
    density = jnp.exp(-jnp.mean((-neg) ** 2, axis=-1)) + noise
    density = density * tm
    mask = density[:, None, :] > density[:, :, None]
    dist_max = jnp.max(dist_matrix.reshape(B, -1), axis=-1)[:, None, None]
    dist = jnp.min(jnp.where(mask, dist_matrix, dist_max), axis=-1)
    score = dist * density
    _, index_down = jax.lax.top_k(score, cluster_num)
    d_gather = jnp.take_along_axis(
        dist_matrix,
        jnp.broadcast_to(index_down[:, :, None], (B, cluster_num, N)), axis=1)
    idx_cluster = jnp.argmin(d_gather, axis=1).astype(jnp.int32)
    return idx_cluster, index_down


def cluster_dpc_knn(token_dict, cluster_num, k=5, token_mask=None, noise_key=None):
    x = token_dict['x']
    B, N, C = x.shape
    if noise_key is not None:
        # deterministic tie-break noise (torch.rand * 1e-6 in reference)
        noise = jax.random.uniform(noise_key, (B, N), jnp.float32) * 1e-6
    else:
        noise = jnp.zeros((B, N), jnp.float32)

    if token_mask is None:
        score = dpc_score_fused(x, noise[:, None, :], k)      # fused Pallas kernel
        _, index_down = jax.lax.top_k(score, cluster_num)     # (B, cluster_num)
        centers = index_points(x, index_down)                 # (B, cluster_num, C)
        idx_cluster = assign_clusters(x, centers)             # Pallas argmin kernel
    else:
        # TODO(synk): masked-token path kept in plain JAX (needs all-batch dist max).
        idx_cluster, index_down = _cluster_dpc_knn_masked_jax(
            x, noise, k, cluster_num, token_mask)

    idx_cluster = idx_cluster.at[jnp.arange(B)[:, None], index_down].set(
        jnp.broadcast_to(jnp.arange(cluster_num, dtype=jnp.int32)[None, :],
                         (B, cluster_num)))
    return idx_cluster, cluster_num, index_down


def merge_tokens(token_dict, idx_cluster, cluster_num, token_weight=None):
    x = token_dict['x']
    idx_token = token_dict['idx_token']
    agg_weight = token_dict['agg_weight']
    B, N, C = x.shape
    if token_weight is None:
        token_weight = jnp.ones((B, N, 1), x.dtype)

    idx = idx_cluster + jnp.arange(B, dtype=idx_cluster.dtype)[:, None] * cluster_num
    idx_flat = idx.reshape(B * N)

    # index_add_ equivalents via segment_sum (no Pallas scatter-add on TPU)
    all_weight = jax.ops.segment_sum(
        token_weight.reshape(B * N, 1), idx_flat,
        num_segments=B * cluster_num) + 1e-6
    norm_weight = token_weight / all_weight[idx]              # (B, N, 1)
    source = (x * norm_weight).astype(x.dtype)
    x_merged = jax.ops.segment_sum(
        source.reshape(B * N, C), idx_flat,
        num_segments=B * cluster_num).reshape(B, cluster_num, C)

    idx_token_new = index_points(idx_cluster[..., None], idx_token)[..., 0]
    weight_t = index_points(norm_weight, idx_token)
    agg_weight_new = agg_weight * weight_t
    # (reference also computes agg_weight_new / max but discards the result)

    return {
        'x': x_merged,
        'token_num': cluster_num,
        'idx_token': idx_token_new,
        'agg_weight': agg_weight_new,
        'mask': None,
    }


class CTM:
    """Clustering-based Token Merging (no trainable parameters)."""

    def __init__(self, sample_ratio, embed_dim, dim_out, k=5):
        self.sample_ratio = sample_ratio
        self.dim_out = dim_out
        self.k = k

    def __call__(self, token_dict, sample_ratio=None, noise_key=None):
        x = token_dict['x']
        B, N, C = x.shape
        token_weight = jnp.ones((B, N), x.dtype)
        if token_dict['mask'] is not None:
            token_weight = jnp.where(token_dict['mask'] > 0, token_weight, -jnp.inf)
        token_weight = token_weight[..., None]

        if sample_ratio is not None:
            cluster_num = max(math.ceil(N * sample_ratio), 1)
        elif self.sample_ratio > 1:
            cluster_num = max(math.ceil(self.sample_ratio), 1)
        else:
            cluster_num = max(math.ceil(N * self.sample_ratio), 1)
        k = min(3, max(cluster_num // 2, 1)) if self.k > cluster_num else self.k

        idx_cluster, cluster_num, center_id = cluster_dpc_knn(
            token_dict, cluster_num, k,
            token_mask=token_dict['mask'], noise_key=noise_key)
        down_dict = merge_tokens(token_dict, idx_cluster, cluster_num, token_weight)
        return down_dict, token_dict, center_id


if __name__ == "__main__":
    B, N, C = 2, 32, 32
    key = jax.random.PRNGKey(0)
    kx, knoise = jax.random.split(key)
    x = jax.random.normal(kx, (B, N, C), jnp.float32)

    token_dict = {
        'x': x,
        'token_num': N,
        'idx_token': jnp.broadcast_to(jnp.arange(N, dtype=jnp.int32)[None, :], (B, N)),
        'agg_weight': jnp.ones((B, N, 1), jnp.float32),
        'mask': None,
    }

    ctm = CTM(sample_ratio=0.25, embed_dim=C, dim_out=C, k=5)
    down_dict, out_token_dict, center_id = ctm(token_dict, noise_key=knoise)

    jax.block_until_ready(down_dict['x'])
    jax.block_until_ready(down_dict['idx_token'])
    jax.block_until_ready(center_id)

    cluster_num = max(math.ceil(N * 0.25), 1)
    assert down_dict['x'].shape == (B, cluster_num, C)
    assert down_dict['idx_token'].shape == (B, N)
    assert down_dict['agg_weight'].shape == (B, N, 1)
    assert center_id.shape == (B, cluster_num)
    assert bool(jnp.all(down_dict['idx_token'] >= 0)) and \
           bool(jnp.all(down_dict['idx_token'] < cluster_num))
    print("KERNEL_OK")
</pallas_src>

<mosaic_0001>
module attributes {stable_mosaic.version = 11 : i64} {
  func.func @_fused_dpc_score_kernel(%arg0: i32, %arg1: memref<1x32x32xf32, #tpu.memory_space<vmem>>, %arg2: memref<1x1x32xf32, #tpu.memory_space<vmem>>, %arg3: memref<1x1x32xf32, #tpu.memory_space<vmem>>) attributes {dimension_semantics = [#tpu.dimension_semantics<parallel>], iteration_bounds = array<i64: 2>, scalar_prefetch = 0 : i64, scratch_operands = 0 : i64, tpu.core_type = #tpu.core_type<tc>, window_params = [{transform_indices = @transform_0, window_bounds = array<i64: 1, 32, 32>}, {transform_indices = @transform_1, window_bounds = array<i64: 1, 1, 32>}, {transform_indices = @transform_2, window_bounds = array<i64: 1, 1, 32>}]} {
    %c0 = arith.constant 0 : index
    %c0_0 = arith.constant 0 : index
    %c0_1 = arith.constant 0 : index
    %0 = vector.load %arg1[%c0, %c0_0, %c0_1] : memref<1x32x32xf32, #tpu.memory_space<vmem>>, vector<1x32x32xf32>
    %1 = vector.shape_cast %0 : vector<1x32x32xf32> to vector<32x32xf32>
    %2 = arith.mulf %1, %1 : vector<32x32xf32>
    %cst = arith.constant dense<0.000000e+00> : vector<32xf32>
    %3 = vector.multi_reduction <add>, %2, %cst [1] : vector<32x32xf32> to vector<32xf32>
    %4 = vector.shape_cast %3 : vector<32xf32> to vector<32x1xf32>
    %cst_2 = arith.constant dense<0.000000e+00> : vector<32x32xf32>
    %5 = tpu.matmul %1, %1, %cst_2 {dimension_numbers = #tpu.dot_dimension_numbers<[1], [1], [0], [0], [0, 0, 1, 0], [], []>} : vector<32x32xf32>, vector<32x32xf32>, vector<32x32xf32> -> vector<32x32xf32>
    %6 = tpu.transpose %4, [1, 0] : vector<32x1xf32> -> vector<1x32xf32>
    %7 = vector.broadcast %4 : vector<32x1xf32> to vector<32x32xf32>
    %8 = vector.broadcast %6 : vector<1x32xf32> to vector<32x32xf32>
    %9 = arith.addf %7, %8 : vector<32x32xf32>
    %cst_3 = arith.constant 2.000000e+00 : f32
    %10 = vector.broadcast %cst_3 : f32 to vector<32x32xf32>
    %11 = arith.mulf %10, %5 : vector<32x32xf32>
    %12 = arith.subf %9, %11 : vector<32x32xf32>
    %cst_4 = arith.constant 0.000000e+00 : f32
    %13 = vector.broadcast %cst_4 : f32 to vector<32x32xf32>
    %14 = arith.maximumf %12, %13 : vector<32x32xf32>
    %15 = tpu.iota {dimensions = array<i32: 1>} : vector<32x32xi32>
    %cst_5 = arith.constant 0.000000e+00 : f32
    %16 = vector.broadcast %cst_5 : f32 to vector<32x1xf32>
    %cst_6 = arith.constant dense<0x7F800000> : vector<32xf32>
    %17 = vector.multi_reduction <minimumf>, %14, %cst_6 [1] : vector<32x32xf32> to vector<32xf32>
    %18 = vector.shape_cast %17 : vector<32xf32> to vector<32x1xf32>
    %19 = arith.addf %16, %18 : vector<32x1xf32>
    %20 = vector.broadcast %18 : vector<32x1xf32> to vector<32x32xf32>
    %21 = arith.cmpf oeq, %14, %20 : vector<32x32xf32>
    %c32_i32 = arith.constant 32 : i32
    %22 = vector.broadcast %c32_i32 : i32 to vector<32x32xi32>
    %23 = arith.select %21, %15, %22 : vector<32x32xi1>, vector<32x32xi32>
    %cst_7 = arith.constant dense<2147483647> : vector<32xi32>
    %24 = vector.multi_reduction <minsi>, %23, %cst_7 [1] : vector<32x32xi32> to vector<32xi32>
    %25 = vector.shape_cast %24 : vector<32xi32> to vector<32x1xi32>
    %26 = vector.broadcast %25 : vector<32x1xi32> to vector<32x32xi32>
    %27 = arith.cmpi eq, %15, %26 : vector<32x32xi32>
    %cst_8 = arith.constant 0x7F800000 : f32
    %28 = vector.broadcast %cst_8 : f32 to vector<32x32xf32>
    %29 = arith.select %27, %28, %14 : vector<32x32xi1>, vector<32x32xf32>
    %cst_9 = arith.constant dense<0x7F800000> : vector<32xf32>
    %30 = vector.multi_reduction <minimumf>, %29, %cst_9 [1] : vector<32x32xf32> to vector<32xf32>
    %31 = vector.shape_cast %30 : vector<32xf32> to vector<32x1xf32>
    %32 = arith.addf %19, %31 : vector<32x1xf32>
    %33 = vector.broadcast %31 : vector<32x1xf32> to vector<32x32xf32>
    %34 = arith.cmpf oeq, %29, %33 : vector<32x32xf32>
    %c32_i32_10 = arith.constant 32 : i32
    %35 = vector.broadcast %c32_i32_10 : i32 to vector<32x32xi32>
    %36 = arith.select %34, %15, %35 : vector<32x32xi1>, vector<32x32xi32>
    %cst_11 = arith.constant dense<2147483647> : vector<32xi32>
    %37 = vector.multi_reduction <minsi>, %36, %cst_11 [1] : vector<32x32xi32> to vector<32xi32>
    %38 = vector.shape_cast %37 : vector<32xi32> to vector<32x1xi32>
    %39 = vector.broadcast %38 : vector<32x1xi32> to vector<32x32xi32>
    %40 = arith.cmpi eq, %15, %39 : vector<32x32xi32>
    %cst_12 = arith.constant 0x7F800000 : f32
    %41 = vector.broadcast %cst_12 : f32 to vector<32x32xf32>
    %42 = arith.select %40, %41, %29 : vector<32x32xi1>, vector<32x32xf32>
    %cst_13 = arith.constant dense<0x7F800000> : vector<32xf32>
    %43 = vector.multi_reduction <minimumf>, %42, %cst_13 [1] : vector<32x32xf32> to vector<32xf32>
    %44 = vector.shape_cast %43 : vector<32xf32> to vector<32x1xf32>
    %45 = arith.addf %32, %44 : vector<32x1xf32>
    %46 = vector.broadcast %44 : vector<32x1xf32> to vector<32x32xf32>
    %47 = arith.cmpf oeq, %42, %46 : vector<32x32xf32>
    %c32_i32_14 = arith.constant 32 : i32
    %48 = vector.broadcast %c32_i32_14 : i32 to vector<32x32xi32>
    %49 = arith.select %47, %15, %48 : vector<32x32xi1>, vector<32x32xi32>
    %cst_15 = arith.constant dense<2147483647> : vector<32xi32>
    %50 = vector.multi_reduction <minsi>, %49, %cst_15 [1] : vector<32x32xi32> to vector<32xi32>
    %51 = vector.shape_cast %50 : vector<32xi32> to vector<32x1xi32>
    %52 = vector.broadcast %51 : vector<32x1xi32> to vector<32x32xi32>
    %53 = arith.cmpi eq, %15, %52 : vector<32x32xi32>
    %cst_16 = arith.constant 0x7F800000 : f32
    %54 = vector.broadcast %cst_16 : f32 to vector<32x32xf32>
    %55 = arith.select %53, %54, %42 : vector<32x32xi1>, vector<32x32xf32>
    %cst_17 = arith.constant dense<0x7F800000> : vector<32xf32>
    %56 = vector.multi_reduction <minimumf>, %55, %cst_17 [1] : vector<32x32xf32> to vector<32xf32>
    %57 = vector.shape_cast %56 : vector<32xf32> to vector<32x1xf32>
    %58 = arith.addf %45, %57 : vector<32x1xf32>
    %59 = vector.broadcast %57 : vector<32x1xf32> to vector<32x32xf32>
    %60 = arith.cmpf oeq, %55, %59 : vector<32x32xf32>
    %c32_i32_18 = arith.constant 32 : i32
    %61 = vector.broadcast %c32_i32_18 : i32 to vector<32x32xi32>
    %62 = arith.select %60, %15, %61 : vector<32x32xi1>, vector<32x32xi32>
    %cst_19 = arith.constant dense<2147483647> : vector<32xi32>
    %63 = vector.multi_reduction <minsi>, %62, %cst_19 [1] : vector<32x32xi32> to vector<32xi32>
    %64 = vector.shape_cast %63 : vector<32xi32> to vector<32x1xi32>
    %65 = vector.broadcast %64 : vector<32x1xi32> to vector<32x32xi32>
    %66 = arith.cmpi eq, %15, %65 : vector<32x32xi32>
    %cst_20 = arith.constant 0x7F800000 : f32
    %67 = vector.broadcast %cst_20 : f32 to vector<32x32xf32>
    %68 = arith.select %66, %67, %55 : vector<32x32xi1>, vector<32x32xf32>
    %cst_21 = arith.constant dense<0x7F800000> : vector<32xf32>
    %69 = vector.multi_reduction <minimumf>, %68, %cst_21 [1] : vector<32x32xf32> to vector<32xf32>
    %70 = vector.shape_cast %69 : vector<32xf32> to vector<32x1xf32>
    %71 = arith.addf %58, %70 : vector<32x1xf32>
    %cst_22 = arith.constant 0.000000e+00 : f32
    %72 = vector.broadcast %cst_22 : f32 to vector<32x1xf32>
    %73 = arith.subf %72, %71 : vector<32x1xf32>
    %cst_23 = arith.constant 6.250000e-03 : f32
    %74 = vector.broadcast %cst_23 : f32 to vector<32x1xf32>
    %75 = arith.mulf %73, %74 : vector<32x1xf32>
    %76 = math.exp %75 : vector<32x1xf32>
    %c0_24 = arith.constant 0 : index
    %c0_25 = arith.constant 0 : index
    %c0_26 = arith.constant 0 : index
    %77 = vector.load %arg2[%c0_24, %c0_25, %c0_26] : memref<1x1x32xf32, #tpu.memory_space<vmem>>, vector<1x1x32xf32>
    %78 = vector.shape_cast %77 : vector<1x1x32xf32> to vector<1x32xf32>
    %79 = tpu.transpose %78, [1, 0] : vector<1x32xf32> -> vector<32x1xf32>
    %80 = arith.addf %76, %79 : vector<32x1xf32>
    %81 = tpu.transpose %80, [1, 0] : vector<32x1xf32> -> vector<1x32xf32>
    %82 = vector.shape_cast %14 : vector<32x32xf32> to vector<1x32x32xf32>
    %cst_27 = arith.constant dense<0xFF800000> : vector<1xf32>
    %83 = vector.multi_reduction <maximumf>, %82, %cst_27 [1, 2] : vector<1x32x32xf32> to vector<1xf32>
    %84 = vector.shape_cast %83 : vector<1xf32> to vector<1x1x1xf32>
    %85 = vector.extract %84[0, 0, 0] : f32 from vector<1x1x1xf32>
    %86 = vector.broadcast %81 : vector<1x32xf32> to vector<32x32xf32>
    %87 = vector.broadcast %80 : vector<32x1xf32> to vector<32x32xf32>
    %88 = arith.cmpf ogt, %86, %87 : vector<32x32xf32>
    %89 = vector.broadcast %85 : f32 to vector<32x32xf32>
    %90 = arith.select %88, %14, %89 : vector<32x32xi1>, vector<32x32xf32>
    %cst_28 = arith.constant dense<0x7F800000> : vector<32xf32>
    %91 = vector.multi_reduction <minimumf>, %90, %cst_28 [1] : vector<32x32xf32> to vector<32xf32>
    %92 = vector.shape_cast %91 : vector<32xf32> to vector<32x1xf32>
    %93 = math.sqrt %92 : vector<32x1xf32>
    %cst_29 = arith.constant 0.176776692 : f32
    %94 = vector.broadcast %cst_29 : f32 to vector<32x1xf32>
    %95 = arith.mulf %93, %94 : vector<32x1xf32>
    %96 = arith.mulf %95, %80 : vector<32x1xf32>
    %97 = tpu.transpose %96, [1, 0] : vector<32x1xf32> -> vector<1x32xf32>
    %c0_30 = arith.constant 0 : index
    %c0_31 = arith.constant 0 : index
    %c0_32 = arith.constant 0 : index
    %98 = vector.load %arg3[%c0_30, %c0_31, %c0_32] : memref<1x1x32xf32, #tpu.memory_space<vmem>>, vector<1x1x32xf32>
    %99 = vector.shape_cast %98 : vector<1x1x32xf32> to vector<1x32xf32>
    %100 = vector.shape_cast %97 : vector<1x32xf32> to vector<1x1x32xf32>
    tpu.vector_store %arg3[%c0_30, %c0_31, %c0_32], %100 {strides = array<i32>} : memref<1x1x32xf32, #tpu.memory_space<vmem>>, vector<1x1x32xf32>,
    return
  }
  func.func @transform_0(%arg0: i32) -> (i32, i32, i32) {
    %c0_i32 = arith.constant 0 : i32
    %c0_i32_0 = arith.constant 0 : i32
    %c0_i32_1 = arith.constant 0 : i32
    return %arg0, %c0_i32, %c0_i32_0 : i32, i32, i32
  }
  func.func @transform_1(%arg0: i32) -> (i32, i32, i32) {
    %c0_i32 = arith.constant 0 : i32
    %c0_i32_0 = arith.constant 0 : i32
    %c0_i32_1 = arith.constant 0 : i32
    return %arg0, %c0_i32, %c0_i32_0 : i32, i32, i32
  }
  func.func @transform_2(%arg0: i32) -> (i32, i32, i32) {
    %c0_i32 = arith.constant 0 : i32
    %c0_i32_0 = arith.constant 0 : i32
    %c0_i32_1 = arith.constant 0 : i32
    return %arg0, %c0_i32, %c0_i32_0 : i32, i32, i32
  }
}

</mosaic_0001>

<llo_original>
// kernel: tpu_custom_call.1
$region0: #{tpu_custom_call.1}
  #allocation0 [shape = 'u32[]', space=smem, size = 0x4, offset = 0x4, fixed_abs, tag = 'smem constant byte address 0x4 - core index']
  #allocation1 [shape = 'u32[144,128]{1,0:T(1,128)}', space=vmem, size = 0x12000, scoped, tag = 'internal scratch']
  %s0 = inlined_call_operand.hbm [shape: f32[2,32,32], index: 0, kind: input, shape index: {}]
  %s1 = inlined_call_operand.vmem [shape: f32[2,1,32], index: 1, kind: input, shape index: {}]
  %s2 = inlined_call_operand.hbm [shape: f32[2,1,32], index: 2, kind: output, shape index: {}]
  %s3 = sld [smem:[#allocation0]]
  $region45: #{tpu_custom_call.1} parent=0
    _
  %s5 = ssub.s32 1, %s3
  %s6 = scalar_select 0, %s5, %s3
  $region1: #{tpu_custom_call.1} parent=0
    #allocation2 [shape = 'u8[32768]{0}', space=vmem, size = 0x8000, scoped, tag = 'input window, operand 0']
    #allocation3 [shape = 's32[2]{0}', space=sflag, size = 0x8, scoped, tag = 'scoped memory for tpu_custom_call.1']
    #allocation4 [shape = 's32[2]{0}', space=sflag, size = 0x8, scoped, tag = 'scoped memory for tpu_custom_call.1']
    #allocation5 [shape = 'u8[1024]{0}', space=vmem, size = 0x400, scoped, tag = 'output window, operand 0']
    %7 = vsyncpa [#allocation3], 0
    %s8 = scalar_lea.sflag [#allocation3], 1
    %9 = vsyncpa %s8, 0
    %10 = vsyncpa [#allocation4], 0
    %s11 = scalar_lea.sflag [#allocation4], 1
    %12 = vsyncpa %s11, 0
    loop: start=0, step=1, limit=4
    $region2: #{tpu_custom_call.1} parent=1 // loop_pre_header
      _
    $region3: #{tpu_custom_call.1} parent=1 // loop_header
      %s14 = sphi 0, %s18
      %p15 = scmp.ge.s32.totalorder %s14, 4
      %s24 = sphi 0, %s26
      %s27 = sphi 0, %s24
      %s28 = sphi 0, %s27
      %s44 = sphi 0, %s28
      %s50 = sphi 0, %s52
      %s53 = sphi 0, %s50
      %s54 = sphi 0, %s53
      %s70 = sphi 0, %s54
      %s76 = sphi 0, %s78
      %s79 = sphi 0, %s76
      %s80 = sphi 0, %s79
      %s96 = sphi 0, %s80
    $region4: #{tpu_custom_call.1} parent=1 // loop_header_branch
      %17 = sbr.rel (%p15) target = $region8
    $region5: #{tpu_custom_call.1} parent=1 // loop_body
      %s19 = ssub.s32 %s14, 1
      %s20 = ssub.s32 %s14, 2
      %s21 = sadd.s32 %s14, 1
      %s22 = ssub.s32 %s14, %s21
      %p23 = scmp.eq.s32.totalorder %s22, 0
      %s25 = sadd.s32 %s24, 1
      %s26 = scalar_select %p23, %s24, %s25
      %p29 = pneg %p23
      %p30 = scmp.eq.s32.totalorder %s14, 1
      %p31 = por %p29, %p30
      %p32 = scmp.ne.s32.totalorder %s24, %s27
      %p33 = scmp.eq.s32.totalorder %s14, 0
      %p34 = por %p32, %p33
      %p35 = scmp.ne.s32.totalorder %s24, %s27
      %p36 = scmp.eq.s32.totalorder %s19, 1
      %p37 = por %p35, %p36
      %p38 = scmp.ne.s32.totalorder %s27, %s28
      %p39 = scmp.eq.s32.totalorder %s19, 0
      %p40 = por %p38, %p39
      %p41 = scmp.ne.s32.totalorder %s27, %s28
      %p42 = scmp.eq.s32.totalorder %s20, 1
      %p43 = por %p41, %p42
      %p45 = scmp.ne.s32.totalorder %s28, %s44
      %p46 = scmp.eq.s32.totalorder %s20, 0
      %p47 = por %p45, %p46
      %s48 = ssub.s32 %s14, %s21
      %p49 = scmp.eq.s32.totalorder %s48, 0
      %s51 = sadd.s32 %s50, 1
      %s52 = scalar_select %p49, %s50, %s51
      %p55 = pneg %p49
      %p56 = scmp.eq.s32.totalorder %s14, 1
      %p57 = por %p55, %p56
      %p58 = scmp.ne.s32.totalorder %s50, %s53
      %p59 = scmp.eq.s32.totalorder %s14, 0
      %p60 = por %p58, %p59
      %p61 = scmp.ne.s32.totalorder %s50, %s53
      %p62 = scmp.eq.s32.totalorder %s19, 1
      %p63 = por %p61, %p62
      %p64 = scmp.ne.s32.totalorder %s53, %s54
      %p65 = scmp.eq.s32.totalorder %s19, 0
      %p66 = por %p64, %p65
      %p67 = scmp.ne.s32.totalorder %s53, %s54
      %p68 = scmp.eq.s32.totalorder %s20, 1
      %p69 = por %p67, %p68
      %p71 = scmp.ne.s32.totalorder %s54, %s70
      %p72 = scmp.eq.s32.totalorder %s20, 0
      %p73 = por %p71, %p72
      %s74 = ssub.s32 %s14, %s21
      %p75 = scmp.eq.s32.totalorder %s74, 0
      %s77 = sadd.s32 %s76, 1
      %s78 = scalar_select %p75, %s76, %s77
      %p81 = pneg %p75
      %p82 = scmp.eq.s32.totalorder %s14, 1
      %p83 = por %p81, %p82
      %p84 = scmp.ne.s32.totalorder %s76, %s79
      %p85 = scmp.eq.s32.totalorder %s14, 0
      %p86 = por %p84, %p85
      %p87 = scmp.ne.s32.totalorder %s76, %s79
      %p88 = scmp.eq.s32.totalorder %s19, 1
      %p89 = por %p87, %p88
      %p90 = scmp.ne.s32.totalorder %s79, %s80
      %p91 = scmp.eq.s32.totalorder %s19, 0
      %p92 = por %p90, %p91
      %p93 = scmp.ne.s32.totalorder %s79, %s80
      %p94 = scmp.eq.s32.totalorder %s20, 1
      %p95 = por %p93, %p94
      %p97 = scmp.ne.s32.totalorder %s80, %s96
      %p98 = scmp.eq.s32.totalorder %s20, 0
      %p99 = por %p97, %p98
      %p100 = scmp.le.s32.totalorder 1, %s14
      %p101 = scmp.lt.s32.totalorder %s14, 3
      %p102 = pnand %p100, %p101
      %p103 = pneg %p102
      // Predicated region
      $region9: #{tpu_custom_call.1} parent=5 // pred_check
        _
      $region10: #{tpu_custom_call.1} parent=5 // pred_check_branch
        %105 = sbr.rel (%p102) target = $region12
      $region11: #{tpu_custom_call.1} parent=5 // pred_region
        %s106 = ssub.s32 %s14, 1
      $region12: #{tpu_custom_call.1} parent=5 // pred_fallthru
        _
      %p107 = scmp.lt.s32.totalorder %s14, 2
      // Predicated region
      $region13: #{tpu_custom_call.1} parent=5 // pred_check
        %p108 = pneg %p107
      $region14: #{tpu_custom_call.1} parent=5 // pred_check_branch
        %110 = sbr.rel (%p108) target = $region16
      $region15: #{tpu_custom_call.1} parent=5 // pred_region
        // Predicated region
        $region17: #{tpu_custom_call.1} parent=15 // pred_check
          %p111 = pneg %p34
        $region18: #{tpu_custom_call.1} parent=15 // pred_check_branch
          %113 = sbr.rel (%p111) target = $region20
        $region19: #{tpu_custom_call.1} parent=15 // pred_region
          %s114 = sand.u32 %s24, 1
          %s115 = scalar_lea.sflag [#allocation3], %s114
          %s116 = sand.u32 %s24, 1
          %s117 = smul.addr %s116, 32
          %s118 = scalar_lea.vmem [#allocation2], %s117
          %s120 = ssub.s32 512, 512
          %121 = vsyncadd %s115, %s120
          %s122 = smul.addr %s14, 4
          %s123 = smul.addr %s122, 128
          %s124 = scalar_lea.hbm %s0, %s123
          %s125 = sshll.u32 %s118, 4
          %s126 = int_to_ptr.vmem [resolvable:$true] %s125
          %131 = dma.hbm_to_vmem [thread:$0]  %s124, 512, %s126, %s115, 128, 128, 8
        $region20: #{tpu_custom_call.1} parent=15 // pred_fallthru
          _
        // Predicated region
        $region21: #{tpu_custom_call.1} parent=15 // pred_check
          %p132 = pneg %p60
        $region22: #{tpu_custom_call.1} parent=15 // pred_check_branch
          %134 = sbr.rel (%p132) target = $region24
        $region23: #{tpu_custom_call.1} parent=15 // pred_region
          %p135 = scmp.lt.s32.totalorder %s14, 1
          %s136 = scalar_select %p135, %s14, 1
          %s137 = scalar_lea.vmem %s1, %s136
        $region24: #{tpu_custom_call.1} parent=15 // pred_fallthru
          _
      $region16: #{tpu_custom_call.1} parent=5 // pred_fallthru
        _
      %p138 = scmp.le.s32.totalorder 1, %s14
      %p139 = scmp.lt.s32.totalorder %s14, 3
      %p140 = pnand %p138, %p139
      %p141 = pneg %p140
      // Predicated region
      $region25: #{tpu_custom_call.1} parent=5 // pred_check
        _
      $region26: #{tpu_custom_call.1} parent=5 // pred_check_branch
        %143 = sbr.rel (%p140) target = $region28
      $region27: #{tpu_custom_call.1} parent=5 // pred_region
        %s144 = ssub.s32 %s14, 1
        %s145 = sand.u32 %s27, 1
        %s146 = scalar_lea.sflag [#allocation3], %s145
        %s147 = sand.u32 %s27, 1
        %s148 = smul.addr %s147, 32
        %s149 = scalar_lea.vmem [#allocation2], %s148
        // Predicated region
        $region29: #{tpu_custom_call.1} parent=27 // pred_check
          %p150 = pneg %p40
        $region30: #{tpu_custom_call.1} parent=27 // pred_check_branch
          %152 = sbr.rel (%p150) target = $region32
        $region31: #{tpu_custom_call.1} parent=27 // pred_region
          %153 = dma.done %s146, 512
        $region32: #{tpu_custom_call.1} parent=27 // pred_fallthru
          _
        %s154 = sand.u32 %s27, 1
        %s155 = scalar_lea.sflag [#allocation3], %s154
        %s156 = sand.u32 %s27, 1
        %s157 = smul.addr %s156, 32
        %s158 = scalar_lea.vmem [#allocation2], %s157
        %p159 = pneg %p40
        %p160 = pneg %p37
        %p161 = scmp.lt.s32.totalorder %s19, 1
        %s162 = scalar_select %p161, %s19, 1
        %s163 = scalar_lea.vmem %s1, %s162
        %p164 = pneg %p66
        %p165 = pneg %p63
        %p166 = pneg %p92
        %p167 = pneg %p89
        %s168 = sand.u32 %s79, 1
        %s169 = scalar_lea.sflag [#allocation4], %s168
        %s170 = sand.u32 %s79, 1
        %s171 = scalar_lea.vmem [#allocation5], %s170
        %p172 = scmp.lt.s32.totalorder %s19, 1
        %s173 = scalar_select %p172, %s19, 1
        %s174 = scalar_lea.vmem %s1, %s173
        %v175 = vld [vmem:[%s149] sm:$0xff]
        %v176 = vld [vmem:[%s149 + $0x8] sm:$0xff]
        %v177 = vld [vmem:[%s149 + $0x10] sm:$0xff]
        %v178 = vld [vmem:[%s149 + $0x18] sm:$0xff]
        %v179 = vmul.f32 %v175, %v175
        %v180 = vmul.f32 %v176, %v176
        %v181 = vmul.f32 %v177, %v177
        %v182 = vmul.f32 %v178, %v178
        %vm183 = vcmask 261120
        %v184 = vsel %vm183, %v179, 0.0
        %185 = vadd.xlane.f32.xlu0 %v184
        %v186 = vpop.xlane.xlu0 %185
        %v187 = vsel %vm183, %v180, 0.0
        %188 = vadd.xlane.f32.xlu0 %v187
        %v189 = vpop.xlane.xlu0 %188
        %v190 = vsel %vm183, %v181, 0.0
        %191 = vadd.xlane.f32.xlu0 %v190
        %v192 = vpop.xlane.xlu0 %191
        %v193 = vsel %vm183, %v182, 0.0
        %194 = vadd.xlane.f32.xlu0 %v193
        %v195 = vpop.xlane.xlu0 %194
        %v197 = vsel %vm183, %v175, 0
        %v200 = vsel %vm183, %v176, 0
        %v203 = vsel %vm183, %v177, 0
        %v206 = vsel %vm183, %v178, 0
        %208 = vmatprep.subr.mxu0 0.0
        %209 = vmatpush1.xpose.msra.mxu0 %v197
        %210 = vmatprep.subr.mxu0 0.0
        %211 = vmatpush1.xpose.msra.mxu0 %v200
        %212 = vmatprep.subr.mxu0 0.0
        %213 = vmatpush1.xpose.msra.mxu0 %v203
        %214 = vmatprep.subr.mxu0 0.0
        %215 = vmatpush1.xpose.msra.mxu0 %v206
        %216 = vmatprep.subr.mxu0 0.0
        %217 = vmatpush1.xpose.msra.mxu0 0.0
        %218 = vmatprep.subr.mxu0 0.0
        %219 = vmatpush1.xpose.msra.mxu0 0.0
        %220 = vmatprep.subr.mxu0 0.0
        %221 = vmatpush1.xpose.msra.mxu0 0.0
        %222 = vmatprep.subr.mxu0 0.0
        %223 = vmatpush1.xpose.msra.mxu0 0.0
        %224 = vmatprep.subr.mxu0 0.0
        %225 = vmatpush1.xpose.msra.mxu0 0.0
        %226 = vmatprep.subr.mxu0 0.0
        %227 = vmatpush1.xpose.msra.mxu0 0.0
        %228 = vmatprep.subr.mxu0 0.0
        %229 = vmatpush1.xpose.msra.mxu0 0.0
        %230 = vmatprep.subr.mxu0 0.0
        %231 = vmatpush1.xpose.msra.mxu0 0.0
        %232 = vmatprep.subr.mxu0 0.0
        %233 = vmatpush1.xpose.msra.mxu0 0.0
        %234 = vmatprep.subr.mxu0 0.0
        %235 = vmatpush1.xpose.msra.mxu0 0.0
        %236 = vmatprep.subr.mxu0 0.0
        %237 = vmatpush1.xpose.msra.mxu0 0.0
        %238 = vmatprep.subr.mxu0 0.0
        %239 = vmatpush1.xpose.msra.mxu0 0.0
        %240 = vmatprep.subr.mxu0 0.0
        %241 = vmatpush1.xpose.msra.mxu0 0.0
        %242 = vmatprep.subr.mxu0 0.0
        %243 = vmatpush1.xpose.msra.mxu0 0.0
        %244 = vmatprep.subr.mxu0 0.0
        %245 = vmatpush1.xpose.msra.mxu0 0.0
        %246 = vmatprep.subr.mxu0 0.0
        %247 = vmatpush1.xpose.msra.mxu0 0.0
        %248 = vmatprep.subr.mxu0 0.0
        %249 = vmatpush1.xpose.msra.mxu0 0.0
        %250 = vmatprep.subr.mxu0 0.0
        %251 = vmatpush1.xpose.msra.mxu0 0.0
        %252 = vmatprep.subr.mxu0 0.0
        %253 = vmatpush1.xpose.msra.mxu0 0.0
        %254 = vmatprep.subr.mxu0 0.0
        %255 = vmatpush1.xpose.msra.mxu0 0.0
        %256 = vmatprep.subr.mxu0 0.0
        %257 = vmatpush1.xpose.msra.mxu0 0.0
        %258 = vmatprep.subr.mxu0 0.0
        %259 = vmatpush1.xpose.msra.mxu0 0.0
        %260 = vmatprep.subr.mxu0 0.0
        %261 = vmatpush1.xpose.msra.mxu0 0.0
        %262 = vmatprep.subr.mxu0 0.0
        %263 = vmatpush1.xpose.msra.mxu0 0.0
        %264 = vmatprep.subr.mxu0 0.0
        %265 = vmatpush1.xpose.msra.mxu0 0.0
        %266 = vmatprep.subr.mxu0 0.0
        %267 = vmatpush1.xpose.msra.mxu0 0.0
        %268 = vmatprep.subr.mxu0 0.0
        %269 = vmatpush1.xpose.msra.mxu0 0.0
        %270 = vmatprep.subr.mxu0 0.0
        %271 = vmatpush1.xpose.msra.mxu0 0.0
        %272 = vmatprep.mubr.f32.mxu0 0.0
        %273 = vmatmul.mubr.f32.gmra.mrb[0].mxu0 %v197
        %v274 = vpop.f32.mrb[0].mxu0
        %v275 = vadd.f32 0.0, %v274
        %v276 = vpop.f32.mrb[0].mxu0
        %277 = vmatprep.mubr.f32.mxu0 0.0
        %278 = vmatmul.mubr.f32.gmra.mrb[0].mxu0 %v200
        %v279 = vpop.f32.mrb[0].mxu0
        %v280 = vadd.f32 0.0, %v279
        %v281 = vpop.f32.mrb[0].mxu0
        %282 = vmatprep.mubr.f32.mxu0 0.0
        %283 = vmatmul.mubr.f32.gmra.mrb[0].mxu0 %v203
        %v284 = vpop.f32.mrb[0].mxu0
        %v285 = vadd.f32 0.0, %v284
        %v286 = vpop.f32.mrb[0].mxu0
        %287 = vmatprep.mubr.f32.mxu0 0.0
        %288 = vmatmul.mubr.f32.gmra.mrb[0].mxu0 %v206
        %v289 = vpop.f32.mrb[0].mxu0
        %v290 = vadd.f32 0.0, %v289
        %v291 = vpop.f32.mrb[0].mxu0
        %292 = vdwg.mxu0
        %293 = vxpose.xlu0.b32.start [1/16] %v186, 128
        %294 = vxpose.xlu0.b32.cont [2/16] %v189, 128
        %295 = vxpose.xlu0.b32.cont [3/16] %v192, 128
        %296 = vxpose.xlu0.b32.cont [4/16] %v195, 128
        %297 = vxpose.xlu0.b32.cont [5/16] 0.0, 128
        %298 = vxpose.xlu0.b32.cont [6/16] 0.0, 128
        %299 = vxpose.xlu0.b32.cont [7/16] 0.0, 128
        %300 = vxpose.xlu0.b32.cont [8/16] 0.0, 128
        %301 = vxpose.xlu0.b32.cont [9/16] 0.0, 128
        %302 = vxpose.xlu0.b32.cont [10/16] 0.0, 128
        %303 = vxpose.xlu0.b32.cont [11/16] 0.0, 128
        %304 = vxpose.xlu0.b32.cont [12/16] 0.0, 128
        %305 = vxpose.xlu0.b32.cont [13/16] 0.0, 128
        %306 = vxpose.xlu0.b32.cont [14/16] 0.0, 128
        %307 = vxpose.xlu0.b32.cont [15/16] 0.0, 128
        %308 = vxpose.xlu0.b32.end [16/16] 0.0, 128
        %v309 = vpop.trf.xlu0
        %v310 = vpop.trf.xlu0
        %v311 = vpop.trf.xlu0
        %v312 = vpop.trf.xlu0
        %v313 = vpop.trf.xlu0
        %v314 = vpop.trf.xlu0
        %v315 = vpop.trf.xlu0
        %v316 = vpop.trf.xlu0
        %v317 = vpop.trf.xlu0
        %v318 = vpop.trf.xlu0
        %v319 = vpop.trf.xlu0
        %v320 = vpop.trf.xlu0
        %v321 = vpop.trf.xlu0
        %v322 = vpop.trf.xlu0
        %v323 = vpop.trf.xlu0
        %v324 = vpop.trf.xlu0
        %v325 = vlaneseq
        %v326 = vshrl.u32 %v325, 7
        %v327 = vsub.s32 0, %v326
        %v328 = vrot.slane %v309, %v327
        %v329 = vadd.f32 %v186, %v328
        %v330 = vadd.f32 %v189, %v328
        %v331 = vadd.f32 %v192, %v328
        %v332 = vadd.f32 %v195, %v328
        %v333 = vmul.f32 %v275, 2.0
        %v334 = vmul.f32 %v280, 2.0
        %v335 = vmul.f32 %v285, 2.0
        %v336 = vmul.f32 %v290, 2.0
        %v337 = vsub.f32 %v329, %v333
        %v338 = vsub.f32 %v330, %v334
        %v339 = vsub.f32 %v331, %v335
        %v340 = vsub.f32 %v332, %v336
        %v341 = vmax.f32 %v337, 0.0
        %v342 = vmax.f32 %v338, 0.0
        %v343 = vmax.f32 %v339, 0.0
        %v344 = vmax.f32 %v340, 0.0
        %v345 = vlaneseq
        %v346 = vand.u32 %v345, 127
        %v347 = vsel %vm183, %v341, inf
        %348 = vmin.xlane.f32.xlu0 %v347
        %v349 = vpop.xlane.xlu0 %348
        %v350 = vsel %vm183, %v342, inf
        %351 = vmin.xlane.f32.xlu0 %v350
        %v352 = vpop.xlane.xlu0 %351
        %v353 = vsel %vm183, %v343, inf
        %354 = vmin.xlane.f32.xlu0 %v353
        %v355 = vpop.xlane.xlu0 %354
        %v356 = vsel %vm183, %v344, inf
        %357 = vmin.xlane.f32.xlu0 %v356
        %v358 = vpop.xlane.xlu0 %357
        %v359 = vadd.f32 %v349, 0.0
        %v360 = vadd.f32 %v352, 0.0
        %v361 = vadd.f32 %v355, 0.0
        %v362 = vadd.f32 %v358, 0.0
        %vm363 = vcmp.eq.f32.partialorder %v341, %v349
        %vm364 = vcmp.eq.f32.partialorder %v342, %v352
        %vm365 = vcmp.eq.f32.partialorder %v343, %v355
        %vm366 = vcmp.eq.f32.partialorder %v344, %v358
        %v367 = vsel %vm363, %v346, 32
        %v368 = vsel %vm364, %v346, 32
        %v369 = vsel %vm365, %v346, 32
        %v370 = vsel %vm366, %v346, 32
        %v371 = vsel %vm183, %v367, 2147483647
        %v372 = vand.u32 %v371, 65535
        %v373 = vshra.s32 %v371, 16
        %v374 = vcvt.s32.f32 %v372
        %v375 = vcvt.s32.f32 %v373
        %376 = vmin.xlane.f32.xlu0 %v375
        %v377 = vpop.xlane.xlu0 %376
        %vm378 = vcmp.eq.f32.partialorder %v375, %v377
        %v379 = vsel %vm378, %v374, inf
        %380 = vmin.xlane.f32.xlu0 %v379
        %v381 = vpop.xlane.xlu0 %380
        %v382 = vcvt.f32.s32 %v381
        %v383 = vcvt.f32.s32 %v377
        %v384 = vshll.u32 %v383, 16
        %v385 = vadd.s32 %v384, %v382
        %v386 = vsel %vm183, %v368, 2147483647
        %v387 = vand.u32 %v386, 65535
        %v388 = vshra.s32 %v386, 16
        %v389 = vcvt.s32.f32 %v387
        %v390 = vcvt.s32.f32 %v388
        %391 = vmin.xlane.f32.xlu0 %v390
        %v392 = vpop.xlane.xlu0 %391
        %vm393 = vcmp.eq.f32.partialorder %v390, %v392
        %v394 = vsel %vm393, %v389, inf
        %395 = vmin.xlane.f32.xlu0 %v394
        %v396 = vpop.xlane.xlu0 %395
        %v397 = vcvt.f32.s32 %v396
        %v398 = vcvt.f32.s32 %v392
        %v399 = vshll.u32 %v398, 16
        %v400 = vadd.s32 %v399, %v397
        %v401 = vsel %vm183, %v369, 2147483647
        %v402 = vand.u32 %v401, 65535
        %v403 = vshra.s32 %v401, 16
        %v404 = vcvt.s32.f32 %v402
        %v405 = vcvt.s32.f32 %v403
        %406 = vmin.xlane.f32.xlu0 %v405
        %v407 = vpop.xlane.xlu0 %406
        %vm408 = vcmp.eq.f32.partialorder %v405, %v407
        %v409 = vsel %vm408, %v404, inf
        %410 = vmin.xlane.f32.xlu0 %v409
        %v411 = vpop.xlane.xlu0 %410
        %v412 = vcvt.f32.s32 %v411
        %v413 = vcvt.f32.s32 %v407
        %v414 = vshll.u32 %v413, 16
        %v415 = vadd.s32 %v414, %v412
        %v416 = vsel %vm183, %v370, 2147483647
        %v417 = vand.u32 %v416, 65535
        %v418 = vshra.s32 %v416, 16
        %v419 = vcvt.s32.f32 %v417
        %v420 = vcvt.s32.f32 %v418
        %421 = vmin.xlane.f32.xlu0 %v420
        %v422 = vpop.xlane.xlu0 %421
        %vm423 = vcmp.eq.f32.partialorder %v420, %v422
        %v424 = vsel %vm423, %v419, inf
        %425 = vmin.xlane.f32.xlu0 %v424
        %v426 = vpop.xlane.xlu0 %425
        %v427 = vcvt.f32.s32 %v426
        %v428 = vcvt.f32.s32 %v422
        %v429 = vshll.u32 %v428, 16
        %v430 = vadd.s32 %v429, %v427
        %vm431 = vcmp.eq.s32.totalorder %v346, %v385
        %vm432 = vcmp.eq.s32.totalorder %v346, %v400
        %vm433 = vcmp.eq.s32.totalorder %v346, %v415
        %vm434 = vcmp.eq.s32.totalorder %v346, %v430
        %v435 = vsel %vm431, inf, %v341
        %v436 = vsel %vm432, inf, %v342
        %v437 = vsel %vm433, inf, %v343
        %v438 = vsel %vm434, inf, %v344
        %v439 = vsel %vm183, %v435, inf
        %440 = vmin.xlane.f32.xlu0 %v439
        %v441 = vpop.xlane.xlu0 %440
        %v442 = vsel %vm183, %v436, inf
        %443 = vmin.xlane.f32.xlu0 %v442
        %v444 = vpop.xlane.xlu0 %443
        %v445 = vsel %vm183, %v437, inf
        %446 = vmin.xlane.f32.xlu0 %v445
        %v447 = vpop.xlane.xlu0 %446
        %v448 = vsel %vm183, %v438, inf
        %449 = vmin.xlane.f32.xlu0 %v448
        %v450 = vpop.xlane.xlu0 %449
        %v451 = vadd.f32 %v359, %v441
        %v452 = vadd.f32 %v360, %v444
        %v453 = vadd.f32 %v361, %v447
        %v454 = vadd.f32 %v362, %v450
        %vm455 = vcmp.eq.f32.partialorder %v435, %v441
        %vm456 = vcmp.eq.f32.partialorder %v436, %v444
        %vm457 = vcmp.eq.f32.partialorder %v437, %v447
        %vm458 = vcmp.eq.f32.partialorder %v438, %v450
        %v459 = vsel %vm455, %v346, 32
        %v460 = vsel %vm456, %v346, 32
        %v461 = vsel %vm457, %v346, 32
        %v462 = vsel %vm458, %v346, 32
        %v463 = vsel %vm183, %v459, 2147483647
        %v464 = vand.u32 %v463, 65535
        %v465 = vshra.s32 %v463, 16
        %v466 = vcvt.s32.f32 %v464
        %v467 = vcvt.s32.f32 %v465
        %468 = vmin.xlane.f32.xlu0 %v467
        %v469 = vpop.xlane.xlu0 %468
        %vm470 = vcmp.eq.f32.partialorder %v467, %v469
        %v471 = vsel %vm470, %v466, inf
        %472 = vmin.xlane.f32.xlu0 %v471
        %v473 = vpop.xlane.xlu0 %472
        %v474 = vcvt.f32.s32 %v473
        %v475 = vcvt.f32.s32 %v469
        %v476 = vshll.u32 %v475, 16
        %v477 = vadd.s32 %v476, %v474
        %v478 = vsel %vm183, %v460, 2147483647
        %v479 = vand.u32 %v478, 65535
        %v480 = vshra.s32 %v478, 16
        %v481 = vcvt.s32.f32 %v479
        %v482 = vcvt.s32.f32 %v480
        %483 = vmin.xlane.f32.xlu0 %v482
        %v484 = vpop.xlane.xlu0 %483
        %vm485 = vcmp.eq.f32.partialorder %v482, %v484
        %v486 = vsel %vm485, %v481, inf
        %487 = vmin.xlane.f32.xlu0 %v486
        %v488 = vpop.xlane.xlu0 %487
        %v489 = vcvt.f32.s32 %v488
        %v490 = vcvt.f32.s32 %v484
        %v491 = vshll.u32 %v490, 16
        %v492 = vadd.s32 %v491, %v489
        %v493 = vsel %vm183, %v461, 2147483647
        %v494 = vand.u32 %v493, 65535
        %v495 = vshra.s32 %v493, 16
        %v496 = vcvt.s32.f32 %v494
        %v497 = vcvt.s32.f32 %v495
        %498 = vmin.xlane.f32.xlu0 %v497
        %v499 = vpop.xlane.xlu0 %498
        %vm500 = vcmp.eq.f32.partialorder %v497, %v499
        %v501 = vsel %vm500, %v496, inf
        %502 = vmin.xlane.f32.xlu0 %v501
        %v503 = vpop.xlane.xlu0 %502
        %v504 = vcvt.f32.s32 %v503
        %v505 = vcvt.f32.s32 %v499
        %v506 = vshll.u32 %v505, 16
        %v507 = vadd.s32 %v506, %v504
        %v508 = vsel %vm183, %v462, 2147483647
        %v509 = vand.u32 %v508, 65535
        %v510 = vshra.s32 %v508, 16
        %v511 = vcvt.s32.f32 %v509
        %v512 = vcvt.s32.f32 %v510
        %513 = vmin.xlane.f32.xlu0 %v512
        %v514 = vpop.xlane.xlu0 %513
        %vm515 = vcmp.eq.f32.partialorder %v512, %v514
        %v516 = vsel %vm515, %v511, inf
        %517 = vmin.xlane.f32.xlu0 %v516
        %v518 = vpop.xlane.xlu0 %517
        %v519 = vcvt.f32.s32 %v518
        %v520 = vcvt.f32.s32 %v514
        %v521 = vshll.u32 %v520, 16
        %v522 = vadd.s32 %v521, %v519
        %vm523 = vcmp.eq.s32.totalorder %v346, %v477
        %vm524 = vcmp.eq.s32.totalorder %v346, %v492
        %vm525 = vcmp.eq.s32.totalorder %v346, %v507
        %vm526 = vcmp.eq.s32.totalorder %v346, %v522
        %v527 = vsel %vm523, inf, %v435
        %v528 = vsel %vm524, inf, %v436
        %v529 = vsel %vm525, inf, %v437
        %v530 = vsel %vm526, inf, %v438
        %v531 = vsel %vm183, %v527, inf
        %532 = vmin.xlane.f32.xlu0 %v531
        %v533 = vpop.xlane.xlu0 %532
        %v534 = vsel %vm183, %v528, inf
        %535 = vmin.xlane.f32.xlu0 %v534
        %v536 = vpop.xlane.xlu0 %535
        %v537 = vsel %vm183, %v529, inf
        %538 = vmin.xlane.f32.xlu0 %v537
        %v539 = vpop.xlane.xlu0 %538
        %v540 = vsel %vm183, %v530, inf
        %541 = vmin.xlane.f32.xlu0 %v540
        %v542 = vpop.xlane.xlu0 %541
        %v543 = vadd.f32 %v451, %v533
        %v544 = vadd.f32 %v452, %v536
        %v545 = vadd.f32 %v453, %v539
        %v546 = vadd.f32 %v454, %v542
        %vm547 = vcmp.eq.f32.partialorder %v527, %v533
        %vm548 = vcmp.eq.f32.partialorder %v528, %v536
        %vm549 = vcmp.eq.f32.partialorder %v529, %v539
        %vm550 = vcmp.eq.f32.partialorder %v530, %v542
        %v551 = vsel %vm547, %v346, 32
        %v552 = vsel %vm548, %v346, 32
        %v553 = vsel %vm549, %v346, 32
        %v554 = vsel %vm550, %v346, 32
        %v555 = vsel %vm183, %v551, 2147483647
        %v556 = vand.u32 %v555, 65535
        %v557 = vshra.s32 %v555, 16
        %v558 = vcvt.s32.f32 %v556
        %v559 = vcvt.s32.f32 %v557
        %560 = vmin.xlane.f32.xlu0 %v559
        %v561 = vpop.xlane.xlu0 %560
        %vm562 = vcmp.eq.f32.partialorder %v559, %v561
        %v563 = vsel %vm562, %v558, inf
        %564 = vmin.xlane.f32.xlu0 %v563
        %v565 = vpop.xlane.xlu0 %564
        %v566 = vcvt.f32.s32 %v565
        %v567 = vcvt.f32.s32 %v561
        %v568 = vshll.u32 %v567, 16
        %v569 = vadd.s32 %v568, %v566
        %v570 = vsel %vm183, %v552, 2147483647
        %v571 = vand.u32 %v570, 65535
        %v572 = vshra.s32 %v570, 16
        %v573 = vcvt.s32.f32 %v571
        %v574 = vcvt.s32.f32 %v572
        %575 = vmin.xlane.f32.xlu0 %v574
        %v576 = vpop.xlane.xlu0 %575
        %vm577 = vcmp.eq.f32.partialorder %v574, %v576
        %v578 = vsel %vm577, %v573, inf
        %579 = vmin.xlane.f32.xlu0 %v578
        %v580 = vpop.xlane.xlu0 %579
        %v581 = vcvt.f32.s32 %v580
        %v582 = vcvt.f32.s32 %v576
        %v583 = vshll.u32 %v582, 16
        %v584 = vadd.s32 %v583, %v581
        %v585 = vsel %vm183, %v553, 2147483647
        %v586 = vand.u32 %v585, 65535
        %v587 = vshra.s32 %v585, 16
        %v588 = vcvt.s32.f32 %v586
        %v589 = vcvt.s32.f32 %v587
        %590 = vmin.xlane.f32.xlu0 %v589
        %v591 = vpop.xlane.xlu0 %590
        %vm592 = vcmp.eq.f32.partialorder %v589, %v591
        %v593 = vsel %vm592, %v588, inf
        %594 = vmin.xlane.f32.xlu0 %v593
        %v595 = vpop.xlane.xlu0 %594
        %v596 = vcvt.f32.s32 %v595
        %v597 = vcvt.f32.s32 %v591
        %v598 = vshll.u32 %v597, 16
        %v599 = vadd.s32 %v598, %v596
        %v600 = vsel %vm183, %v554, 2147483647
        %v601 = vand.u32 %v600, 65535
        %v602 = vshra.s32 %v600, 16
        %v603 = vcvt.s32.f32 %v601
        %v604 = vcvt.s32.f32 %v602
        %605 = vmin.xlane.f32.xlu0 %v604
        %v606 = vpop.xlane.xlu0 %605
        %vm607 = vcmp.eq.f32.partialorder %v604, %v606
        %v608 = vsel %vm607, %v603, inf
        %609 = vmin.xlane.f32.xlu0 %v608
        %v610 = vpop.xlane.xlu0 %609
        %v611 = vcvt.f32.s32 %v610
        %v612 = vcvt.f32.s32 %v606
        %v613 = vshll.u32 %v612, 16
        %v614 = vadd.s32 %v613, %v611
        %vm615 = vcmp.eq.s32.totalorder %v346, %v569
        %vm616 = vcmp.eq.s32.totalorder %v346, %v584
        %vm617 = vcmp.eq.s32.totalorder %v346, %v599
        %vm618 = vcmp.eq.s32.totalorder %v346, %v614
        %v619 = vsel %vm615, inf, %v527
        %v620 = vsel %vm616, inf, %v528
        %v621 = vsel %vm617, inf, %v529
        %v622 = vsel %vm618, inf, %v530
        %v623 = vsel %vm183, %v619, inf
        %624 = vmin.xlane.f32.xlu0 %v623
        %v625 = vpop.xlane.xlu0 %624
        %v626 = vsel %vm183, %v620, inf
        %627 = vmin.xlane.f32.xlu0 %v626
        %v628 = vpop.xlane.xlu0 %627
        %v629 = vsel %vm183, %v621, inf
        %630 = vmin.xlane.f32.xlu0 %v629
        %v631 = vpop.xlane.xlu0 %630
        %v632 = vsel %vm183, %v622, inf
        %633 = vmin.xlane.f32.xlu0 %v632
        %v634 = vpop.xlane.xlu0 %633
        %v635 = vadd.f32 %v543, %v625
        %v636 = vadd.f32 %v544, %v628
        %v637 = vadd.f32 %v545, %v631
        %v638 = vadd.f32 %v546, %v634
        %vm639 = vcmp.eq.f32.partialorder %v619, %v625
        %vm640 = vcmp.eq.f32.partialorder %v620, %v628
        %vm641 = vcmp.eq.f32.partialorder %v621, %v631
        %vm642 = vcmp.eq.f32.partialorder %v622, %v634
        %v643 = vsel %vm639, %v346, 32
        %v644 = vsel %vm640, %v346, 32
        %v645 = vsel %vm641, %v346, 32
        %v646 = vsel %vm642, %v346, 32
        %v647 = vsel %vm183, %v643, 2147483647
        %v648 = vand.u32 %v647, 65535
        %v649 = vshra.s32 %v647, 16
        %v650 = vcvt.s32.f32 %v648
        %v651 = vcvt.s32.f32 %v649
        %652 = vmin.xlane.f32.xlu0 %v651
        %v653 = vpop.xlane.xlu0 %652
        %vm654 = vcmp.eq.f32.partialorder %v651, %v653
        %v655 = vsel %vm654, %v650, inf
        %656 = vmin.xlane.f32.xlu0 %v655
        %v657 = vpop.xlane.xlu0 %656
        %v658 = vcvt.f32.s32 %v657
        %v659 = vcvt.f32.s32 %v653
        %v660 = vshll.u32 %v659, 16
        %v661 = vadd.s32 %v660, %v658
        %v662 = vsel %vm183, %v644, 2147483647
        %v663 = vand.u32 %v662, 65535
        %v664 = vshra.s32 %v662, 16
        %v665 = vcvt.s32.f32 %v663
        %v666 = vcvt.s32.f32 %v664
        %667 = vmin.xlane.f32.xlu0 %v666
        %v668 = vpop.xlane.xlu0 %667
        %vm669 = vcmp.eq.f32.partialorder %v666, %v668
        %v670 = vsel %vm669, %v665, inf
        %671 = vmin.xlane.f32.xlu0 %v670
        %v672 = vpop.xlane.xlu0 %671
        %v673 = vcvt.f32.s32 %v672
        %v674 = vcvt.f32.s32 %v668
        %v675 = vshll.u32 %v674, 16
        %v676 = vadd.s32 %v675, %v673
        %v677 = vsel %vm183, %v645, 2147483647
        %v678 = vand.u32 %v677, 65535
        %v679 = vshra.s32 %v677, 16
        %v680 = vcvt.s32.f32 %v678
        %v681 = vcvt.s32.f32 %v679
        %682 = vmin.xlane.f32.xlu0 %v681
        %v683 = vpop.xlane.xlu0 %682
        %vm684 = vcmp.eq.f32.partialorder %v681, %v683
        %v685 = vsel %vm684, %v680, inf
        %686 = vmin.xlane.f32.xlu0 %v685
        %v687 = vpop.xlane.xlu0 %686
        %v688 = vcvt.f32.s32 %v687
        %v689 = vcvt.f32.s32 %v683
        %v690 = vshll.u32 %v689, 16
        %v691 = vadd.s32 %v690, %v688
        %v692 = vsel %vm183, %v646, 2147483647
        %v693 = vand.u32 %v692, 65535
        %v694 = vshra.s32 %v692, 16
        %v695 = vcvt.s32.f32 %v693
        %v696 = vcvt.s32.f32 %v694
        %697 = vmin.xlane.f32.xlu0 %v696
        %v698 = vpop.xlane.xlu0 %697
        %vm699 = vcmp.eq.f32.partialorder %v696, %v698
        %v700 = vsel %vm699, %v695, inf
        %701 = vmin.xlane.f32.xlu0 %v700
        %v702 = vpop.xlane.xlu0 %701
        %v703 = vcvt.f32.s32 %v702
        %v704 = vcvt.f32.s32 %v698
        %v705 = vshll.u32 %v704, 16
        %v706 = vadd.s32 %v705, %v703
        %vm707 = vcmp.eq.s32.totalorder %v346, %v661
        %vm708 = vcmp.eq.s32.totalorder %v346, %v676
        %vm709 = vcmp.eq.s32.totalorder %v346, %v691
        %vm710 = vcmp.eq.s32.totalorder %v346, %v706
        %v711 = vsel %vm707, inf, %v619
        %v712 = vsel %vm708, inf, %v620
        %v713 = vsel %vm709, inf, %v621
        %v714 = vsel %vm710, inf, %v622
        %v715 = vsel %vm183, %v711, inf
        %716 = vmin.xlane.f32.xlu0 %v715
        %v717 = vpop.xlane.xlu0 %716
        %v718 = vsel %vm183, %v712, inf
        %719 = vmin.xlane.f32.xlu0 %v718
        %v720 = vpop.xlane.xlu0 %719
        %v721 = vsel %vm183, %v713, inf
        %722 = vmin.xlane.f32.xlu0 %v721
        %v723 = vpop.xlane.xlu0 %722
        %v724 = vsel %vm183, %v714, inf
        %725 = vmin.xlane.f32.xlu0 %v724
        %v726 = vpop.xlane.xlu0 %725
        %v727 = vadd.f32 %v635, %v717
        %v728 = vadd.f32 %v636, %v720
        %v729 = vadd.f32 %v637, %v723
        %v730 = vadd.f32 %v638, %v726
        %v731 = vsub.f32 0.0, %v727
        %v732 = vsub.f32 0.0, %v728
        %v733 = vsub.f32 0.0, %v729
        %v734 = vsub.f32 0.0, %v730
        %v735 = vmul.f32 %v731, 0.00625
        %v736 = vmul.f32 %v732, 0.00625
        %v737 = vmul.f32 %v733, 0.00625
        %v738 = vmul.f32 %v734, 0.00625
        %v739 = vmul.f32 %v735, 1.442695
        %v740 = vpow.pop %v739
        %v741 = vmul.f32 %v736, 1.442695
        %v742 = vpow.pop %v741
        %v743 = vmul.f32 %v737, 1.442695
        %v744 = vpow.pop %v743
        %v745 = vmul.f32 %v738, 1.442695
        %v746 = vpow.pop %v745
        %v747 = vld [vmem:[%s174] sm:$0x1]
        %748 = vxpose.xlu0.b32.start [1/16] %v747, 128
        %749 = vxpose.xlu0.b32.cont [2/16] 0.0, 128
        %750 = vxpose.xlu0.b32.cont [3/16] 0.0, 128
        %751 = vxpose.xlu0.b32.cont [4/16] 0.0, 128
        %752 = vxpose.xlu0.b32.cont [5/16] 0.0, 128
        %753 = vxpose.xlu0.b32.cont [6/16] 0.0, 128
        %754 = vxpose.xlu0.b32.cont [7/16] 0.0, 128
        %755 = vxpose.xlu0.b32.cont [8/16] 0.0, 128
        %756 = vxpose.xlu0.b32.cont [9/16] 0.0, 128
        %757 = vxpose.xlu0.b32.cont [10/16] 0.0, 128
        %758 = vxpose.xlu0.b32.cont [11/16] 0.0, 128
        %759 = vxpose.xlu0.b32.cont [12/16] 0.0, 128
        %760 = vxpose.xlu0.b32.cont [13/16] 0.0, 128
        %761 = vxpose.xlu0.b32.cont [14/16] 0.0, 128
        %762 = vxpose.xlu0.b32.cont [15/16] 0.0, 128
        %763 = vxpose.xlu0.b32.end [16/16] 0.0, 128
        %v764 = vpop.trf.xlu0
        %v765 = vpop.trf.xlu0
        %v766 = vpop.trf.xlu0
        %v767 = vpop.trf.xlu0
        %v768 = vpop.trf.xlu0
        %v769 = vpop.trf.xlu0
        %v770 = vpop.trf.xlu0
        %v771 = vpop.trf.xlu0
        %v772 = vpop.trf.xlu0
        %v773 = vpop.trf.xlu0
        %v774 = vpop.trf.xlu0
        %v775 = vpop.trf.xlu0
        %v776 = vpop.trf.xlu0
        %v777 = vpop.trf.xlu0
        %v778 = vpop.trf.xlu0
        %v779 = vpop.trf.xlu0
        %v780 = vadd.f32 %v740, %v764
        %v781 = vadd.f32 %v742, %v765
        %v782 = vadd.f32 %v744, %v766
        %v783 = vadd.f32 %v746, %v767
        %784 = vxpose.xlu0.b32.start [1/16] %v780, 128
        %785 = vxpose.xlu0.b32.cont [2/16] %v781, 128
        %786 = vxpose.xlu0.b32.cont [3/16] %v782, 128
        %787 = vxpose.xlu0.b32.cont [4/16] %v783, 128
        %788 = vxpose.xlu0.b32.cont [5/16] 0.0, 128
        %789 = vxpose.xlu0.b32.cont [6/16] 0.0, 128
        %790 = vxpose.xlu0.b32.cont [7/16] 0.0, 128
        %791 = vxpose.xlu0.b32.cont [8/16] 0.0, 128
        %792 = vxpose.xlu0.b32.cont [9/16] 0.0, 128
        %793 = vxpose.xlu0.b32.cont [10/16] 0.0, 128
        %794 = vxpose.xlu0.b32.cont [11/16] 0.0, 128
        %795 = vxpose.xlu0.b32.cont [12/16] 0.0, 128
        %796 = vxpose.xlu0.b32.cont [13/16] 0.0, 128
        %797 = vxpose.xlu0.b32.cont [14/16] 0.0, 128
        %798 = vxpose.xlu0.b32.cont [15/16] 0.0, 128
        %799 = vxpose.xlu0.b32.end [16/16] 0.0, 128
        %v800 = vpop.trf.xlu0
        %v801 = vpop.trf.xlu0
        %v802 = vpop.trf.xlu0
        %v803 = vpop.trf.xlu0
        %v804 = vpop.trf.xlu0
        %v805 = vpop.trf.xlu0
        %v806 = vpop.trf.xlu0
        %v807 = vpop.trf.xlu0
        %v808 = vpop.trf.xlu0
        %v809 = vpop.trf.xlu0
        %v810 = vpop.trf.xlu0
        %v811 = vpop.trf.xlu0
        %v812 = vpop.trf.xlu0
        %v813 = vpop.trf.xlu0
        %v814 = vpop.trf.xlu0
        %v815 = vpop.trf.xlu0
        %v816 = vsel %vm183, %v341, -inf
        %v817 = vsel %vm183, %v342, -inf
        %v818 = vsel %vm183, %v343, -inf
        %v819 = vsel %vm183, %v344, -inf
        %v820 = vmax.f32 %v816, %v817
        %v821 = vmax.f32 %v818, %v819
        %v822 = vmax.f32 %v820, %v821
        %823 = vmax.xlane.f32.xlu0 %v822
        %v824 = vpop.xlane.xlu0 %823
        %v825 = vrot.slane %v824, 4
        %v826 = vmax.f32 %v824, %v825
        %v827 = vrot.slane %v826, 2
        %v828 = vmax.f32 %v826, %v827
        %v829 = vrot.slane %v828, 1
        %v830 = vmax.f32 %v828, %v829
        %s831 = vtos %v830
        %v832 = vlaneseq
        %v833 = vshrl.u32 %v832, 7
        %v834 = vsub.s32 0, %v833
        %v835 = vrot.slane %v800, %v834
        %837 = vset.pattern.permute.xlu0 0
        %838 = vperm.xlu0 %837, %v780
        %v839 = vpop.permute.xlu0 %838
        %842 = vset.pattern.permute.xlu0 0
        %843 = vperm.xlu0 %842, %v781
        %v844 = vpop.permute.xlu0 %843
        %847 = vset.pattern.permute.xlu0 0
        %848 = vperm.xlu0 %847, %v782
        %v849 = vpop.permute.xlu0 %848
        %852 = vset.pattern.permute.xlu0 0
        %853 = vperm.xlu0 %852, %v783
        %v854 = vpop.permute.xlu0 %853
        %vm856 = vcmp.gt.f32.partialorder %v835, %v839
        %vm857 = vcmp.gt.f32.partialorder %v835, %v844
        %vm858 = vcmp.gt.f32.partialorder %v835, %v849
        %vm859 = vcmp.gt.f32.partialorder %v835, %v854
        %v860 = vstv %s831
        %v861 = vsel %vm856, %v341, %v860
        %v862 = vsel %vm857, %v342, %v860
        %v863 = vsel %vm858, %v343, %v860
        %v864 = vsel %vm859, %v344, %v860
        %v865 = vsel %vm183, %v861, inf
        %866 = vmin.xlane.f32.xlu0 %v865
        %v867 = vpop.xlane.xlu0 %866
        %v868 = vsel %vm183, %v862, inf
        %869 = vmin.xlane.f32.xlu0 %v868
        %v870 = vpop.xlane.xlu0 %869
        %v871 = vsel %vm183, %v863, inf
        %872 = vmin.xlane.f32.xlu0 %v871
        %v873 = vpop.xlane.xlu0 %872
        %v874 = vsel %vm183, %v864, inf
        %875 = vmin.xlane.f32.xlu0 %v874
        %v876 = vpop.xlane.xlu0 %875
        %v877 = vrsqrt.pop %v867
        %v878 = vmul.f32 %v867, %v877
        %vm879 = vcmp.eq.f32.partialorder %v867, inf
        %v880 = vsel %vm879, %v867, %v878
        %vm881 = vcmp.eq.f32.partialorder %v867, 0.0
        %v882 = vand.u32 %v867, 2147483648
        %v883 = vsel %vm881, %v882, %v880
        %v884 = vrsqrt.pop %v870
        %v885 = vmul.f32 %v870, %v884
        %vm886 = vcmp.eq.f32.partialorder %v870, inf
        %v887 = vsel %vm886, %v870, %v885
        %vm888 = vcmp.eq.f32.partialorder %v870, 0.0
        %v889 = vand.u32 %v870, 2147483648
        %v890 = vsel %vm888, %v889, %v887
        %v891 = vrsqrt.pop %v873
        %v892 = vmul.f32 %v873, %v891
        %vm893 = vcmp.eq.f32.partialorder %v873, inf
        %v894 = vsel %vm893, %v873, %v892
        %vm895 = vcmp.eq.f32.partialorder %v873, 0.0
        %v896 = vand.u32 %v873, 2147483648
        %v897 = vsel %vm895, %v896, %v894
        %v898 = vrsqrt.pop %v876
        %v899 = vmul.f32 %v876, %v898
        %vm900 = vcmp.eq.f32.partialorder %v876, inf
        %v901 = vsel %vm900, %v876, %v899
        %vm902 = vcmp.eq.f32.partialorder %v876, 0.0
        %v903 = vand.u32 %v876, 2147483648
        %v904 = vsel %vm902, %v903, %v901
        %v905 = vmul.f32 %v883, 0.17677669
        %v906 = vmul.f32 %v890, 0.17677669
        %v907 = vmul.f32 %v897, 0.17677669
        %v908 = vmul.f32 %v904, 0.17677669
        %v909 = vmul.f32 %v905, %v780
        %v910 = vmul.f32 %v906, %v781
        %v911 = vmul.f32 %v907, %v782
        %v912 = vmul.f32 %v908, %v783
        %913 = vxpose.xlu0.b32.start [1/16] %v909, 128
        %914 = vxpose.xlu0.b32.cont [2/16] %v910, 128
        %915 = vxpose.xlu0.b32.cont [3/16] %v911, 128
        %916 = vxpose.xlu0.b32.cont [4/16] %v912, 128
        %917 = vxpose.xlu0.b32.cont [5/16] 0.0, 128
        %918 = vxpose.xlu0.b32.cont [6/16] 0.0, 128
        %919 = vxpose.xlu0.b32.cont [7/16] 0.0, 128
        %920 = vxpose.xlu0.b32.cont [8/16] 0.0, 128
        %921 = vxpose.xlu0.b32.cont [9/16] 0.0, 128
        %922 = vxpose.xlu0.b32.cont [10/16] 0.0, 128
        %923 = vxpose.xlu0.b32.cont [11/16] 0.0, 128
        %924 = vxpose.xlu0.b32.cont [12/16] 0.0, 128
        %925 = vxpose.xlu0.b32.cont [13/16] 0.0, 128
        %926 = vxpose.xlu0.b32.cont [14/16] 0.0, 128
        %927 = vxpose.xlu0.b32.cont [15/16] 0.0, 128
        %928 = vxpose.xlu0.b32.end [16/16] 0.0, 128
        %v929 = vpop.trf.xlu0
        %v930 = vpop.trf.xlu0
        %v931 = vpop.trf.xlu0
        %v932 = vpop.trf.xlu0
        %v933 = vpop.trf.xlu0
        %v934 = vpop.trf.xlu0
        %v935 = vpop.trf.xlu0
        %v936 = vpop.trf.xlu0
        %v937 = vpop.trf.xlu0
        %v938 = vpop.trf.xlu0
        %v939 = vpop.trf.xlu0
        %v940 = vpop.trf.xlu0
        %v941 = vpop.trf.xlu0
        %v942 = vpop.trf.xlu0
        %v943 = vpop.trf.xlu0
        %v944 = vpop.trf.xlu0
        %vm945 = vcmask 253952
        %946 = vst.msk [vmem:[%s171] sm:$0x1] %vm945, %v929
        %s947 = sand.u32 %s79, 1
        %s948 = scalar_lea.sflag [#allocation4], %s947
        %s949 = sand.u32 %s79, 1
        %s950 = scalar_lea.vmem [#allocation5], %s949
        // Predicated region
        $region33: #{tpu_custom_call.1} parent=27 // pred_check
          %p951 = pneg %p89
        $region34: #{tpu_custom_call.1} parent=27 // pred_check_branch
          %953 = sbr.rel (%p951) target = $region36
        $region35: #{tpu_custom_call.1} parent=27 // pred_region
          %s955 = ssub.s32 16, 16
          %956 = vsyncadd %s948, %s955
          %s957 = smul.addr %s19, 16
          %s958 = scalar_lea.hbm %s2, %s957
          %s960 = sshll.u32 %s950, 4
          %s961 = int_to_ptr.vmem [resolvable:$true] %s960
          %963 = dma.vmem_to_hbm [thread:$0]  %s961, 16, %s958, %s948
        $region36: #{tpu_custom_call.1} parent=27 // pred_fallthru
          _
      $region28: #{tpu_custom_call.1} parent=5 // pred_fallthru
        _
      %p964 = scmp.le.s32.totalorder 2, %s14
      // Predicated region
      $region37: #{tpu_custom_call.1} parent=5 // pred_check
        %p965 = pneg %p964
      $region38: #{tpu_custom_call.1} parent=5 // pred_check_branch
        %967 = sbr.rel (%p965) target = $region40
      $region39: #{tpu_custom_call.1} parent=5 // pred_region
        %s968 = ssub.s32 %s14, 2
        // Predicated region
        $region41: #{tpu_custom_call.1} parent=39 // pred_check
          %p969 = pneg %p95
        $region42: #{tpu_custom_call.1} parent=39 // pred_check_branch
          %971 = sbr.rel (%p969) target = $region44
        $region43: #{tpu_custom_call.1} parent=39 // pred_region
          %s972 = sand.u32 %s80, 1
          %s973 = scalar_lea.sflag [#allocation4], %s972
          %s974 = sand.u32 %s80, 1
          %s975 = scalar_lea.vmem [#allocation5], %s974
          %976 = dma.done %s973, 16
        $region44: #{tpu_custom_call.1} parent=39 // pred_fallthru
          _
      $region40: #{tpu_custom_call.1} parent=5 // pred_fallthru
        _
    $region6: #{tpu_custom_call.1} parent=1 // loop_footer
      %s18 = sadd.s32 1, %s14
    $region7: #{tpu_custom_call.1} parent=1 // loop_footer_branch
      %13 = sbr.rel target = $region3
    $region8: #{tpu_custom_call.1} parent=1 // loop_exit
      _
    %977 = vsyncpa [#allocation3], 1
    %s978 = scalar_lea.sflag [#allocation3], 1
    %979 = vsyncpa %s978, 1
    %980 = vsyncpa [#allocation4], 1
    %s981 = scalar_lea.sflag [#allocation4], 1
    %982 = vsyncpa %s981, 1

</llo_original>
